<compile_context>
chip_gen: v6e
topology: v6e:2x2x1
jax: 0.10.0
libtpu: 0.0.40
codegen_flags: <defaults>
</compile_context>

<pallas_src>
import functools

import jax
import jax.numpy as jnp
from jax.experimental import pallas as pl
from jax.experimental.pallas import tpu as pltpu


def _round_up(x: int, m: int) -> int:
    return ((x + m - 1) // m) * m


def _cdiv(a: int, b: int) -> int:
    return -(-a // b)


def _choose_tile(d: int, candidates) -> int:
    """Pick the tile (<= d) minimizing padding of d; ties -> larger tile."""
    best_key, best_t = None, None
    for t in candidates:
        if t > d:
            continue
        waste = _round_up(d, t) - d
        key = (waste, -t)
        if best_key is None or key < best_key:
            best_key, best_t = key, t
    return d if best_t is None else best_t


# Tile ladders. Sublane (batch) tiles must be multiples of 8; lane (N, K)
# tiles must be multiples of 128.  The maxima keep the double-buffered f32
# working set (x + w + out tiles, x2) under ~40 MiB.
_SUBLANE_LADDER = (512, 384, 256, 128)
_LANE_LADDER = (512, 384, 256, 128)
_K_LADDER = (2048, 1536, 1024, 768, 512, 384, 256, 128)


def _linear_kernel(x_ref, wt_ref, b_ref, o_ref, *, compute_dtype):
    # x_ref:  (tm, tk)  activation tile
    # wt_ref: (tk, tn)  weight tile, already in (D_in, D_out) layout
    # b_ref:  (1,  tn)  bias tile (resident across i and k)
    # o_ref:  (tm, tn)  f32 output tile, doubles as the accumulator
    #                   (resident across k: its index_map ignores k)
    @pl.when(pl.program_id(2) == 0)
    def _seed_with_bias():
        # Seeding with the bias removes a separate finalize pass and the need
        # for an f32 VMEM accumulator scratch (output dtype is f32).
        o_ref[...] = jnp.broadcast_to(b_ref[...], o_ref.shape)

    x = x_ref[...]
    w = wt_ref[...]
    if compute_dtype is not None:
        # Optional MXU-rate path; accumulation stays f32.
        x = x.astype(compute_dtype)
        w = w.astype(compute_dtype)
    o_ref[...] += jnp.dot(x, w, preferred_element_type=jnp.float32)


@functools.partial(jax.jit, static_argnames=("tm", "tn", "tk", "compute_dtype"))
def _linear_pallas(x, weight, bias, *, tm, tn, tk, compute_dtype=None):
    B, D_in = x.shape
    D_out = weight.shape[0]

    Bp = _round_up(B, tm)
    Kp = _round_up(D_in, tk)
    Np = _round_up(D_out, tn)

    # One relayout of the weight to MXU-native (K, N); under jit the transpose
    # and pad fuse into a single copy.  (In a real model, store the parameter
    # pre-transposed as (D_in, D_out) so this is a one-time cost.)
    w_t = weight.T
    x_p = x if (Bp == B and Kp == D_in) else jnp.pad(
        x, ((0, Bp - B), (0, Kp - D_in)))
    w_p = w_t if (Kp == D_in and Np == D_out) else jnp.pad(
        w_t, ((0, Kp - D_in), (0, Np - D_out)))
    b_p = (bias if Np == D_out else jnp.pad(bias, (0, Np - D_out))).reshape(1, Np)

    grid = (Bp // tm, Np // tn, Kp // tk)

    # CostEstimate on padded shapes, counting re-streaming:
    # x is streamed once per j block, w once per i block.
    cost = pl.CostEstimate(
        flops=2 * Bp * Kp * Np,
        transcendentals=0,
        bytes_accessed=4 * (Bp * Kp * grid[1] + Kp * Np * grid[0] + Np + Bp * Np),
    )

    # Double-buffered x/w/out tiles + margin, capped below v7x's 64 MiB
    # physical VMEM per TensorCore, floored at the 32 MiB default scope.
    tile_bytes = 4 * (tm * tk + tk * tn + tm * tn)
    vmem_limit = int(min(48 << 20, max(32 << 20, 2 * tile_bytes + (4 << 20))))

    kernel = functools.partial(_linear_kernel, compute_dtype=compute_dtype)

    y_p = pl.pallas_call(
        kernel,
        out_shape=jax.ShapeDtypeStruct((Bp, Np), jnp.float32),
        grid_spec=pltpu.PrefetchScalarGridSpec(
            num_scalar_prefetch=0,
            grid=grid,
            in_specs=[
                # x tile changes with (i, k)
                pl.BlockSpec((tm, tk), lambda i, j, k: (i, k)),
                # weight tile (K, N layout) changes with (k, j)
                pl.BlockSpec((tk, tn), lambda i, j, k: (k, j)),
                # bias tile depends only on j -> resident across i, k
                pl.BlockSpec((1, tn), lambda i, j, k: (0, j)),
            ],
            out_specs=pl.BlockSpec((tm, tn), lambda i, j, k: (i, j)),
        ),
        compiler_params=pltpu.CompilerParams(
            dimension_semantics=("parallel", "parallel", "arbitrary"),
            vmem_limit_bytes=vmem_limit,
        ),
        cost_estimate=cost,
    )(x_p, w_p, b_p)

    # Slice the lane-dense padded result back to the logical shape.
    return y_p[:B, :D_out]


def linear_forward(x, weight, bias, *, compute_dtype=None, force_pallas=False):
    """y = x @ weight.T + bias, matching torch.nn.Linear semantics.

    x:      (B, D_in)      float32
    weight: (D_out, D_in)  float32  (native PyTorch layout)
    bias:   (D_out,)       float32
    """
    B, D_in = x.shape
    D_out = weight.shape[0]

    # Tiny-shape bypass: for sub-tile problems the pallas_call launch and
    # padding copies dominate; plain XLA fusion is strictly faster.
    if not force_pallas and (B * D_in * D_out) < (128 * 128 * 128):
        return x @ weight.T + bias

    # Base hardware alignment: sublane (B) -> 8, lanes (D_in, D_out) -> 128.
    Bp = _round_up(B, 8)
    Kp = _round_up(D_in, 128)
    Np = _round_up(D_out, 128)

    # Padding-aware tile selection (the whole dim is a candidate when small
    # enough, giving zero padding and a single block along that axis).
    tm = _choose_tile(Bp, _SUBLANE_LADDER + ((Bp,) if Bp <= 512 else ()))
    tk = _choose_tile(Kp, _K_LADDER + ((Kp,) if Kp <= 2048 else ()))
    tn = _choose_tile(Np, _LANE_LADDER + ((Np,) if Np <= 512 else ()))

    # v7x has 2 TensorCores per chip: if both parallel axes collapsed to a
    # single block, shrink tn so the output-N axis has >= 2 blocks.
    if _cdiv(Bp, tm) == 1 and _cdiv(Np, tn) == 1 and Np >= 256:
        small = tuple(t for t in _LANE_LADDER if 2 * t <= Np)
        if small:
            tn = _choose_tile(Np, small)

    return _linear_pallas(x, weight, bias, tm=tm, tn=tn, tk=tk,
                          compute_dtype=compute_dtype)


if __name__ == "__main__":
    key = jax.random.PRNGKey(0)
    kx, kw, kb, kx2, kw2, kb2 = jax.random.split(key, 6)

    # ---- 1) Small shape implied by the module, forced through Pallas ------
    batch, input_dim, output_dim = 8, 32, 16
    bound = 1.0 / (input_dim ** 0.5)
    x = jax.random.normal(kx, (batch, input_dim), dtype=jnp.float32)
    weight = jax.random.uniform(kw, (output_dim, input_dim),
                                minval=-bound, maxval=bound, dtype=jnp.float32)
    bias = jax.random.uniform(kb, (output_dim,),
                              minval=-bound, maxval=bound, dtype=jnp.float32)

    y = linear_forward(x, weight, bias, force_pallas=True)
    jax.block_until_ready(y)
    y_ref = x @ weight.T + bias
    assert y.shape == (batch, output_dim)
    assert jnp.allclose(y, y_ref, atol=1e-5, rtol=1e-5)

    # ---- 2) Awkward medium shape to exercise the tiled / padded path ------
    B2, K2, N2 = 300, 640, 384
    bound2 = 1.0 / (K2 ** 0.5)
    x2 = jax.random.normal(kx2, (B2, K2), dtype=jnp.float32)
    w2 = jax.random.uniform(kw2, (N2, K2),
                            minval=-bound2, maxval=bound2, dtype=jnp.float32)
    b2 = jax.random.uniform(kb2, (N2,),
                            minval=-bound2, maxval=bound2, dtype=jnp.float32)

    y2 = linear_forward(x2, w2, b2)
    jax.block_until_ready(y2)
    y2_ref = x2 @ w2.T + b2
    assert y2.shape == (B2, N2)
    assert jnp.allclose(y2, y2_ref, atol=1e-4, rtol=1e-4)

    print("KERNEL_OK")
</pallas_src>

<mosaic_0001>
module attributes {stable_mosaic.version = 11 : i64} {
  func.func @_linear_kernel(%arg0: i32, %arg1: i32, %arg2: i32, %arg3: memref<8x128xf32, #tpu.memory_space<vmem>>, %arg4: memref<128x128xf32, #tpu.memory_space<vmem>>, %arg5: memref<1x128xf32, #tpu.memory_space<vmem>>, %arg6: memref<8x128xf32, #tpu.memory_space<vmem>>) attributes {dimension_semantics = [#tpu.dimension_semantics<parallel>, #tpu.dimension_semantics<parallel>, #tpu.dimension_semantics<arbitrary>], iteration_bounds = array<i64: 1, 1, 1>, scalar_prefetch = 0 : i64, scratch_operands = 0 : i64, tpu.core_type = #tpu.core_type<tc>, window_params = [{transform_indices = @transform_0, window_bounds = array<i64: 8, 128>}, {transform_indices = @transform_1, window_bounds = array<i64: 128, 128>}, {transform_indices = @transform_2, window_bounds = array<i64: 1, 128>}, {transform_indices = @transform_3, window_bounds = array<i64: 8, 128>}]} {
    %c0_i32 = arith.constant 0 : i32
    %0 = arith.cmpi eq, %arg2, %c0_i32 : i32
    %1 = arith.extui %0 : i1 to i32
    %c0_i32_0 = arith.constant 0 : i32
    %2 = arith.cmpi ne, %1, %c0_i32_0 : i32
    scf.if %2 {
      %c0_8 = arith.constant 0 : index
      %c0_9 = arith.constant 0 : index
      %9 = vector.load %arg5[%c0_8, %c0_9] : memref<1x128xf32, #tpu.memory_space<vmem>>, vector<1x128xf32>
      %10 = vector.shape_cast %9 : vector<1x128xf32> to vector<1x128xf32>
      %11 = vector.broadcast %10 : vector<1x128xf32> to vector<8x128xf32>
      %c0_10 = arith.constant 0 : index
      %c0_11 = arith.constant 0 : index
      %12 = vector.load %arg6[%c0_10, %c0_11] : memref<8x128xf32, #tpu.memory_space<vmem>>, vector<8x128xf32>
      tpu.vector_store %arg6[%c0_10, %c0_11], %11 {strides = array<i32>} : memref<8x128xf32, #tpu.memory_space<vmem>>, vector<8x128xf32>,
    } else {
    }
    %c0 = arith.constant 0 : index
    %c0_1 = arith.constant 0 : index
    %3 = vector.load %arg3[%c0, %c0_1] : memref<8x128xf32, #tpu.memory_space<vmem>>, vector<8x128xf32>
    %c0_2 = arith.constant 0 : index
    %c0_3 = arith.constant 0 : index
    %4 = vector.load %arg4[%c0_2, %c0_3] : memref<128x128xf32, #tpu.memory_space<vmem>>, vector<128x128xf32>
    %c0_4 = arith.constant 0 : index
    %c0_5 = arith.constant 0 : index
    %5 = vector.load %arg6[%c0_4, %c0_5] : memref<8x128xf32, #tpu.memory_space<vmem>>, vector<8x128xf32>
    %cst = arith.constant dense<0.000000e+00> : vector<8x128xf32>
    %6 = tpu.matmul %3, %4, %cst {dimension_numbers = #tpu.dot_dimension_numbers<[1], [0], [0], [1], [0, 0, 1, 1], [], []>} : vector<8x128xf32>, vector<128x128xf32>, vector<8x128xf32> -> vector<8x128xf32>
    %7 = arith.addf %5, %6 : vector<8x128xf32>
    %c0_6 = arith.constant 0 : index
    %c0_7 = arith.constant 0 : index
    %8 = vector.load %arg6[%c0_6, %c0_7] : memref<8x128xf32, #tpu.memory_space<vmem>>, vector<8x128xf32>
    tpu.vector_store %arg6[%c0_6, %c0_7], %7 {strides = array<i32>} : memref<8x128xf32, #tpu.memory_space<vmem>>, vector<8x128xf32>,
    return
  }
  func.func @transform_0(%arg0: i32, %arg1: i32, %arg2: i32) -> (i32, i32) {
    %c0_i32 = arith.constant 0 : i32
    return %arg0, %arg2 : i32, i32
  }
  func.func @transform_1(%arg0: i32, %arg1: i32, %arg2: i32) -> (i32, i32) {
    %c0_i32 = arith.constant 0 : i32
    return %arg2, %arg1 : i32, i32
  }
  func.func @transform_2(%arg0: i32, %arg1: i32, %arg2: i32) -> (i32, i32) {
    %c0_i32 = arith.constant 0 : i32
    %c0_i32_0 = arith.constant 0 : i32
    return %c0_i32, %arg1 : i32, i32
  }
  func.func @transform_3(%arg0: i32, %arg1: i32, %arg2: i32) -> (i32, i32) {
    %c0_i32 = arith.constant 0 : i32
    return %arg0, %arg1 : i32, i32
  }
}

</mosaic_0001>

<llo_original>
// kernel: _linear_pallas.1
$region0: #{_linear_pallas.1}
  #allocation0 [shape = 'u32[]', space=smem, size = 0x4, offset = 0x4, fixed_abs, tag = 'smem constant byte address 0x4 - core index']
  #allocation1 [shape = 'u32[144,128]{1,0:T(1,128)}', space=vmem, size = 0x12000, scoped, tag = 'internal scratch']
  %s0 = inlined_call_operand.vmem [shape: f32[8,128], index: 0, kind: input, shape index: {}]
  %s1 = inlined_call_operand.vmem [shape: f32[128,128], index: 1, kind: input, shape index: {}]
  %s2 = inlined_call_operand.vmem [shape: f32[1,128], index: 2, kind: input, shape index: {}]
  %s3 = inlined_call_operand.hbm [shape: f32[8,128], index: 3, kind: output, shape index: {}]
  %s4 = sld [smem:[#allocation0]]
  $region26: #{_linear_pallas.1} parent=0
    _
  %s6 = ssub.s32 1, %s4
  %s7 = scalar_select 0, %s6, %s4
  $region1: #{_linear_pallas.1} parent=0
    #allocation2 [shape = 'u8[4096]{0}', space=vmem, size = 0x1000, scoped, tag = 'output window, operand 0, single buffered']
    #allocation3 [shape = 's32[1]{0}', space=sflag, size = 0x4, scoped, tag = 'scoped memory for _linear_pallas.1']
    %8 = vsyncpa [#allocation3], 0
    // Predicated region
    $region2: #{_linear_pallas.1} parent=1 // pred_check
      _
    $region3: #{_linear_pallas.1} parent=1 // pred_check_branch
      %10 = sbr.rel (0) target = $region5
    $region4: #{_linear_pallas.1} parent=1 // pred_region
      _
    $region5: #{_linear_pallas.1} parent=1 // pred_fallthru
      _
    // Predicated region
    $region6: #{_linear_pallas.1} parent=1 // pred_check
      _
    $region7: #{_linear_pallas.1} parent=1 // pred_check_branch
      %12 = sbr.rel (0) target = $region9
    $region8: #{_linear_pallas.1} parent=1 // pred_region
      _
    $region9: #{_linear_pallas.1} parent=1 // pred_fallthru
      _
    // Predicated region
    $region10: #{_linear_pallas.1} parent=1 // pred_check
      _
    $region11: #{_linear_pallas.1} parent=1 // pred_check_branch
      %14 = sbr.rel (0) target = $region13
    $region12: #{_linear_pallas.1} parent=1 // pred_region
      _
    $region13: #{_linear_pallas.1} parent=1 // pred_fallthru
      _
    %p15 = scmp.eq.s32.totalorder 0, 0
    // Predicated region
    $region14: #{_linear_pallas.1} parent=1 // pred_check
      %p16 = pneg %p15
    $region15: #{_linear_pallas.1} parent=1 // pred_check_branch
      %18 = sbr.rel (%p16) target = $region17
    $region16: #{_linear_pallas.1} parent=1 // pred_region
      %v19 = vld [vmem:[%s2] sm:$0x1]
      %v21 = vlaneseq
      %v22 = vshrl.u32 %v21, 7
      %v23 = vsub.s32 0, %v22
      %v24 = vrot.slane %v19, %v23
      %26 = vst [vmem:[#allocation2] sm:$0xff] %v24
    $region17: #{_linear_pallas.1} parent=1 // pred_fallthru
      _
    %v27 = vld [vmem:[%s0] sm:$0xff]
    %v28 = vld [vmem:[%s1] sm:$0xff]
    %v29 = vld [vmem:[%s1 + $0x8] sm:$0xff]
    %v30 = vld [vmem:[%s1 + $0x10] sm:$0xff]
    %v31 = vld [vmem:[%s1 + $0x18] sm:$0xff]
    %v32 = vld [vmem:[%s1 + $0x20] sm:$0xff]
    %v33 = vld [vmem:[%s1 + $0x28] sm:$0xff]
    %v34 = vld [vmem:[%s1 + $0x30] sm:$0xff]
    %v35 = vld [vmem:[%s1 + $0x38] sm:$0xff]
    %v36 = vld [vmem:[%s1 + $0x40] sm:$0xff]
    %v37 = vld [vmem:[%s1 + $0x48] sm:$0xff]
    %v38 = vld [vmem:[%s1 + $0x50] sm:$0xff]
    %v39 = vld [vmem:[%s1 + $0x58] sm:$0xff]
    %v40 = vld [vmem:[%s1 + $0x60] sm:$0xff]
    %v41 = vld [vmem:[%s1 + $0x68] sm:$0xff]
    %v42 = vld [vmem:[%s1 + $0x70] sm:$0xff]
    %v43 = vld [vmem:[%s1 + $0x78] sm:$0xff]
    %v44 = vld [vmem:[#allocation2] sm:$0xff]
    %45 = vmatprep.subr.mxu0 0.0
    %46 = vmatpush1.msra.mxu0 %v43
    %47 = vmatprep.subr.mxu0 0.0
    %48 = vmatpush1.msra.mxu0 %v42
    %49 = vmatprep.subr.mxu0 0.0
    %50 = vmatpush1.msra.mxu0 %v41
    %51 = vmatprep.subr.mxu0 0.0
    %52 = vmatpush1.msra.mxu0 %v40
    %53 = vmatprep.subr.mxu0 0.0
    %54 = vmatpush1.msra.mxu0 %v39
    %55 = vmatprep.subr.mxu0 0.0
    %56 = vmatpush1.msra.mxu0 %v38
    %57 = vmatprep.subr.mxu0 0.0
    %58 = vmatpush1.msra.mxu0 %v37
    %59 = vmatprep.subr.mxu0 0.0
    %60 = vmatpush1.msra.mxu0 %v36
    %61 = vmatprep.subr.mxu0 0.0
    %62 = vmatpush1.msra.mxu0 %v35
    %63 = vmatprep.subr.mxu0 0.0
    %64 = vmatpush1.msra.mxu0 %v34
    %65 = vmatprep.subr.mxu0 0.0
    %66 = vmatpush1.msra.mxu0 %v33
    %67 = vmatprep.subr.mxu0 0.0
    %68 = vmatpush1.msra.mxu0 %v32
    %69 = vmatprep.subr.mxu0 0.0
    %70 = vmatpush1.msra.mxu0 %v31
    %71 = vmatprep.subr.mxu0 0.0
    %72 = vmatpush1.msra.mxu0 %v30
    %73 = vmatprep.subr.mxu0 0.0
    %74 = vmatpush1.msra.mxu0 %v29
    %75 = vmatprep.subr.mxu0 0.0
    %76 = vmatpush1.msra.mxu0 %v28
    %77 = vmatprep.subr.mxu0 0.0
    %78 = vmatpush2.msra.mxu0 0.0
    %79 = vmatprep.subr.mxu0 0.0
    %80 = vmatpush2.msra.mxu0 0.0
    %81 = vmatprep.subr.mxu0 0.0
    %82 = vmatpush2.msra.mxu0 0.0
    %83 = vmatprep.subr.mxu0 0.0
    %84 = vmatpush2.msra.mxu0 0.0
    %85 = vmatprep.subr.mxu0 0.0
    %86 = vmatpush2.msra.mxu0 0.0
    %87 = vmatprep.subr.mxu0 0.0
    %88 = vmatpush2.msra.mxu0 0.0
    %89 = vmatprep.subr.mxu0 0.0
    %90 = vmatpush2.msra.mxu0 0.0
    %91 = vmatprep.subr.mxu0 0.0
    %92 = vmatpush2.msra.mxu0 0.0
    %93 = vmatprep.subr.mxu0 0.0
    %94 = vmatpush2.msra.mxu0 0.0
    %95 = vmatprep.subr.mxu0 0.0
    %96 = vmatpush2.msra.mxu0 0.0
    %97 = vmatprep.subr.mxu0 0.0
    %98 = vmatpush2.msra.mxu0 0.0
    %99 = vmatprep.subr.mxu0 0.0
    %100 = vmatpush2.msra.mxu0 0.0
    %101 = vmatprep.subr.mxu0 0.0
    %102 = vmatpush2.msra.mxu0 0.0
    %103 = vmatprep.subr.mxu0 0.0
    %104 = vmatpush2.msra.mxu0 0.0
    %105 = vmatprep.subr.mxu0 0.0
    %106 = vmatpush2.msra.mxu0 0.0
    %107 = vmatprep.subr.mxu0 0.0
    %108 = vmatpush2.msra.mxu0 0.0
    %109 = vmatprep.mubr.f32.mxu0 0.0
    %110 = vmatmul.mubr.f32.gmra.mxu0 %v27
    %v111 = vpop.f32.mrf.mxu0
    %v112 = vadd.f32 0.0, %v111
    %v113 = vpop.f32.mrf.mxu0
    %114 = vdwg.mxu0
    %v115 = vadd.f32 %v44, %v112
    %116 = vst [vmem:[#allocation2] sm:$0xff] %v115
    // Predicated region
    $region18: #{_linear_pallas.1} parent=1 // pred_check
      _
    $region19: #{_linear_pallas.1} parent=1 // pred_check_branch
      %118 = sbr.rel (0) target = $region21
    $region20: #{_linear_pallas.1} parent=1 // pred_region
      %s120 = ssub.s32 128, 128
      %121 = vsyncadd [#allocation3], %s120
      %s123 = sshll.u32 [#allocation2], 4
      %s124 = int_to_ptr.vmem [resolvable:$true] %s123
      %126 = dma.vmem_to_hbm [thread:$0]  %s124, 128, %s3, [#allocation3]
    $region21: #{_linear_pallas.1} parent=1 // pred_fallthru
      _
    // Predicated region
    $region22: #{_linear_pallas.1} parent=1 // pred_check
      _
    $region23: #{_linear_pallas.1} parent=1 // pred_check_branch
      %128 = sbr.rel (0) target = $region25
    $region24: #{_linear_pallas.1} parent=1 // pred_region
      %129 = dma.done [#allocation3], 128
    $region25: #{_linear_pallas.1} parent=1 // pred_fallthru
      _
    %130 = vsyncpa [#allocation3], 1

</llo_original>
